<compile_context>
chip_gen: v7x
topology: tpu7x:2x2x1
jax: 0.10.0
libtpu: 0.0.40
codegen_flags: <defaults>
</compile_context>

<pallas_src>
import jax
import jax.numpy as jnp
from jax.experimental import pallas as pl
from jax.experimental.pallas import tpu as pltpu


def _round_up(x, m):
    return ((x + m - 1) // m) * m


def _proj_kernel(x_ref, w_ref, b_ref, o_ref, acc_ref):
    # x_ref: (tm, tk)   activations tile (already in MXU dtype)
    # w_ref: (tk, tn)   weight tile, pre-transposed to (K, N)
    # b_ref: (1, tn)    bias tile (f32)
    # o_ref: (tm, tn)   output tile (resident across the K grid axis)
    # acc_ref: (tm, tn) f32 accumulator scratch
    k = pl.program_id(2)
    nk = pl.num_programs(2)

    partial = jnp.dot(x_ref[...], w_ref[...],
                      preferred_element_type=jnp.float32)

    is_first = k == 0
    is_last = k == nk - 1

    # Single-K-step fast path: no accumulator round-trip at all.
    @pl.when(jnp.logical_and(is_first, is_last))
    def _():
        o_ref[...] = (partial
                      + b_ref[...].astype(jnp.float32)).astype(o_ref.dtype)

    # First of several K steps: direct write (no zero-init store + reload).
    @pl.when(jnp.logical_and(is_first, jnp.logical_not(is_last)))
    def _():
        acc_ref[...] = partial

    # Middle K steps: accumulate.
    @pl.when(jnp.logical_and(jnp.logical_not(is_first),
                             jnp.logical_not(is_last)))
    def _():
        acc_ref[...] += partial

    # Last of several K steps: fold accumulator + this partial + bias, cast.
    @pl.when(jnp.logical_and(jnp.logical_not(is_first), is_last))
    def _():
        o_ref[...] = (acc_ref[...] + partial
                      + b_ref[...].astype(jnp.float32)).astype(o_ref.dtype)


def _vmem_limit_bytes():
    cap = 64 * 1024 * 1024
    try:
        cap = pltpu.get_tpu_info().vmem_capacity_bytes
    except Exception:
        pass
    # ~75% of physical per-core VMEM: ~48 MiB on v7x (64 MiB VMEM),
    # capped at 96 MiB on v5e/v6e (128 MiB VMEM).
    return int(min(cap * 3 // 4, 96 * 1024 * 1024))


def minigpt_forward(x, weight, bias, *, tm=512, tn=1024, tk=1024,
                    mxu_dtype=jnp.bfloat16):
    """Minigpt projector: merge 4 tokens, then Linear(4*C -> hidden_size).

    x: (B, T, C); weight: (N, 4*C) [torch nn.Linear layout]; bias: (N,).
    Returns (B, T // 4, N) in x.dtype.
    """
    b, num_tokens, c = x.shape
    if num_tokens % 4 != 0:
        raise ValueError("num_tokens must be divisible by 4")
    n_out, k_in = weight.shape
    if k_in != 4 * c:
        raise ValueError("weight must have shape (hidden_size, 4 * C)")

    out_dtype = x.dtype
    m = b * (num_tokens // 4)
    k_dim = 4 * c

    # Token-merge view (pure layout glue) + one-time casts to the MXU dtype.
    x_flat = x.reshape(m, k_dim).astype(mxu_dtype)
    # One-time transpose to (K, N): in-kernel contraction needs no relayout.
    w_t = weight.T.astype(mxu_dtype)

    # ---- Tile selection -----------------------------------------------------
    # M first: projector M = B*T/4 is usually small; a single M tile means the
    # weight streams from HBM exactly once.
    tm = min(tm, _round_up(m, 16))
    m_pad = _round_up(m, tm)
    grid_m = m_pad // tm

    n_aligned = _round_up(n_out, 128)
    tn = min(tn, n_aligned)
    # Keep at least two N tiles when grid_m == 1 so both v7x TCs stay busy.
    if grid_m == 1 and n_aligned // tn < 2 and n_aligned >= 256:
        tn = _round_up(pl.cdiv(n_aligned, 2), 128)
    n_pad = _round_up(n_out, tn)
    grid_n = n_pad // tn

    tk = min(tk, _round_up(k_dim, 128))
    k_pad = _round_up(k_dim, tk)
    grid_k = k_pad // tk

    # ---- Zero padding (padded K contributes 0; padded M/N sliced off) ------
    if (m_pad, k_pad) != (m, k_dim):
        x_flat = jnp.pad(x_flat, ((0, m_pad - m), (0, k_pad - k_dim)))
    if (k_pad, n_pad) != (k_dim, n_out):
        w_t = jnp.pad(w_t, ((0, k_pad - k_dim), (0, n_pad - n_out)))
    b2d = bias.reshape(1, n_out).astype(jnp.float32)
    if n_pad != n_out:
        b2d = jnp.pad(b2d, ((0, 0), (0, n_pad - n_out)))

    grid = (grid_m, grid_n, grid_k)

    in_bytes = jnp.dtype(mxu_dtype).itemsize
    out_bytes = jnp.dtype(out_dtype).itemsize
    cost = pl.CostEstimate(
        flops=2 * m_pad * n_pad * k_pad,
        transcendentals=0,
        bytes_accessed=(x_flat.size * in_bytes * grid_n     # x streamed per N tile
                        + w_t.size * in_bytes * grid_m      # w streamed per M tile
                        + b2d.size * 4 * grid_m
                        + m_pad * n_pad * out_bytes),
    )

    out_flat = pl.pallas_call(
        _proj_kernel,
        out_shape=jax.ShapeDtypeStruct((m_pad, n_pad), out_dtype),
        grid_spec=pltpu.PrefetchScalarGridSpec(
            num_scalar_prefetch=0,
            grid=grid,
            in_specs=[
                pl.BlockSpec((tm, tk), lambda i, j, kk: (i, kk)),
                pl.BlockSpec((tk, tn), lambda i, j, kk: (kk, j)),
                pl.BlockSpec((1, tn), lambda i, j, kk: (0, j)),
            ],
            out_specs=pl.BlockSpec((tm, tn), lambda i, j, kk: (i, j)),
            scratch_shapes=[pltpu.VMEM((tm, tn), jnp.float32)],
        ),
        compiler_params=pltpu.CompilerParams(
            dimension_semantics=("parallel", "parallel", "arbitrary"),
            vmem_limit_bytes=_vmem_limit_bytes(),
        ),
        cost_estimate=cost,
    )(x_flat, w_t, b2d)

    out = out_flat[:m, :n_out]
    return out.reshape(b, num_tokens // 4, n_out)


if __name__ == "__main__":
    # config.mm_hidden_size = 32, config.hidden_size = 64
    mm_hidden_size = 32
    hidden_size = 64
    batch = 2
    num_tokens = 8            # divisible by 4

    key = jax.random.PRNGKey(0)
    kx, kw, kb, kx2, kw2, kb2 = jax.random.split(key, 6)

    x = jax.random.normal(kx, (batch, num_tokens, mm_hidden_size), jnp.float32)
    # nn.Linear(inc*4, ouc): weight (ouc, inc*4), bias (ouc,)
    weight = jax.random.normal(kw, (hidden_size, mm_hidden_size * 4),
                               jnp.float32) * 0.02
    bias = jax.random.normal(kb, (hidden_size,), jnp.float32) * 0.02

    # Pure-JAX reference.
    ref = (x.reshape(batch, num_tokens // 4, mm_hidden_size * 4) @ weight.T
           + bias)

    # Default (perf) path: bf16 operands (cast once in wrapper), f32 acc.
    out = minigpt_forward(x, weight, bias)
    out = jax.block_until_ready(out)
    assert out.shape == (batch, num_tokens // 4, hidden_size)
    assert jnp.allclose(out, ref, atol=3e-2, rtol=3e-2), (
        float(jnp.max(jnp.abs(out - ref))))

    # Full-precision path: exact check of the tiling / bias / padding logic.
    out_f32 = minigpt_forward(x, weight, bias, mxu_dtype=jnp.float32)
    out_f32 = jax.block_until_ready(out_f32)
    assert jnp.allclose(out_f32, ref, atol=1e-4, rtol=1e-4), (
        float(jnp.max(jnp.abs(out_f32 - ref))))

    # Multi-K-step path (K = 256 with tk = 128 -> 2 K steps), with N = 48
    # (not a multiple of 128) to exercise N padding + accumulate branches.
    c2, n2 = 64, 48
    x2 = jax.random.normal(kx2, (batch, num_tokens, c2), jnp.float32)
    w2 = jax.random.normal(kw2, (n2, c2 * 4), jnp.float32) * 0.02
    b2 = jax.random.normal(kb2, (n2,), jnp.float32) * 0.02
    ref2 = x2.reshape(batch, num_tokens // 4, c2 * 4) @ w2.T + b2
    out2 = minigpt_forward(x2, w2, b2, tk=128, mxu_dtype=jnp.float32)
    out2 = jax.block_until_ready(out2)
    assert out2.shape == (batch, num_tokens // 4, n2)
    assert jnp.allclose(out2, ref2, atol=1e-4, rtol=1e-4), (
        float(jnp.max(jnp.abs(out2 - ref2))))

    print("KERNEL_OK")
</pallas_src>

<mosaic_0001>
module attributes {stable_mosaic.version = 11 : i64} {
  func.func @_proj_kernel(%arg0: i32, %arg1: i32, %arg2: i32, %arg3: memref<16x128xbf16, #tpu.memory_space<vmem>>, %arg4: memref<128x128xbf16, #tpu.memory_space<vmem>>, %arg5: memref<1x128xf32, #tpu.memory_space<vmem>>, %arg6: memref<16x128xf32, #tpu.memory_space<vmem>>, %arg7: memref<16x128xf32, #tpu.memory_space<vmem>>) attributes {dimension_semantics = [#tpu.dimension_semantics<parallel>, #tpu.dimension_semantics<parallel>, #tpu.dimension_semantics<arbitrary>], iteration_bounds = array<i64: 1, 1, 1>, scalar_prefetch = 0 : i64, scratch_operands = 1 : i64, tpu.core_type = #tpu.core_type<tc>, window_params = [{transform_indices = @transform_0, window_bounds = array<i64: 16, 128>}, {transform_indices = @transform_1, window_bounds = array<i64: 128, 128>}, {transform_indices = @transform_2, window_bounds = array<i64: 1, 128>}, {transform_indices = @transform_3, window_bounds = array<i64: 16, 128>}]} {
    %c0 = arith.constant 0 : index
    %c0_0 = arith.constant 0 : index
    %0 = vector.load %arg3[%c0, %c0_0] : memref<16x128xbf16, #tpu.memory_space<vmem>>, vector<16x128xbf16>
    %c0_1 = arith.constant 0 : index
    %c0_2 = arith.constant 0 : index
    %1 = vector.load %arg4[%c0_1, %c0_2] : memref<128x128xbf16, #tpu.memory_space<vmem>>, vector<128x128xbf16>
    %cst = arith.constant dense<0.000000e+00> : vector<16x128xf32>
    %2 = tpu.matmul %0, %1, %cst {dimension_numbers = #tpu.dot_dimension_numbers<[1], [0], [0], [1], [0, 0, 1, 1], [], []>} : vector<16x128xbf16>, vector<128x128xbf16>, vector<16x128xf32> -> vector<16x128xf32>
    %c0_i32 = arith.constant 0 : i32
    %3 = arith.cmpi eq, %arg2, %c0_i32 : i32
    %c0_i32_3 = arith.constant 0 : i32
    %4 = arith.cmpi eq, %arg2, %c0_i32_3 : i32
    %5 = arith.andi %3, %4 : i1
    %6 = arith.extui %5 : i1 to i32
    %c0_i32_4 = arith.constant 0 : i32
    %7 = arith.cmpi ne, %6, %c0_i32_4 : i32
    scf.if %7 {
      %c0_11 = arith.constant 0 : index
      %c0_12 = arith.constant 0 : index
      %21 = vector.load %arg5[%c0_11, %c0_12] : memref<1x128xf32, #tpu.memory_space<vmem>>, vector<1x128xf32>
      %22 = vector.broadcast %21 : vector<1x128xf32> to vector<16x128xf32>
      %23 = arith.addf %2, %22 : vector<16x128xf32>
      %c0_13 = arith.constant 0 : index
      %c0_14 = arith.constant 0 : index
      %24 = vector.load %arg6[%c0_13, %c0_14] : memref<16x128xf32, #tpu.memory_space<vmem>>, vector<16x128xf32>
      tpu.vector_store %arg6[%c0_13, %c0_14], %23 {strides = array<i32>} : memref<16x128xf32, #tpu.memory_space<vmem>>, vector<16x128xf32>,
    } else {
    }
    %true = arith.constant true
    %8 = arith.xori %4, %true : i1
    %9 = arith.andi %3, %8 : i1
    %10 = arith.extui %9 : i1 to i32
    %c0_i32_5 = arith.constant 0 : i32
    %11 = arith.cmpi ne, %10, %c0_i32_5 : i32
    scf.if %11 {
      %c0_11 = arith.constant 0 : index
      %c0_12 = arith.constant 0 : index
      %21 = vector.load %arg7[%c0_11, %c0_12] : memref<16x128xf32, #tpu.memory_space<vmem>>, vector<16x128xf32>
      tpu.vector_store %arg7[%c0_11, %c0_12], %2 {strides = array<i32>} : memref<16x128xf32, #tpu.memory_space<vmem>>, vector<16x128xf32>,
    } else {
    }
    %true_6 = arith.constant true
    %12 = arith.xori %3, %true_6 : i1
    %true_7 = arith.constant true
    %13 = arith.xori %4, %true_7 : i1
    %14 = arith.andi %12, %13 : i1
    %15 = arith.extui %14 : i1 to i32
    %c0_i32_8 = arith.constant 0 : i32
    %16 = arith.cmpi ne, %15, %c0_i32_8 : i32
    scf.if %16 {
      %c0_11 = arith.constant 0 : index
      %c0_12 = arith.constant 0 : index
      %21 = vector.load %arg7[%c0_11, %c0_12] : memref<16x128xf32, #tpu.memory_space<vmem>>, vector<16x128xf32>
      %22 = arith.addf %21, %2 : vector<16x128xf32>
      %c0_13 = arith.constant 0 : index
      %c0_14 = arith.constant 0 : index
      %23 = vector.load %arg7[%c0_13, %c0_14] : memref<16x128xf32, #tpu.memory_space<vmem>>, vector<16x128xf32>
      tpu.vector_store %arg7[%c0_13, %c0_14], %22 {strides = array<i32>} : memref<16x128xf32, #tpu.memory_space<vmem>>, vector<16x128xf32>,
    } else {
    }
    %true_9 = arith.constant true
    %17 = arith.xori %3, %true_9 : i1
    %18 = arith.andi %17, %4 : i1
    %19 = arith.extui %18 : i1 to i32
    %c0_i32_10 = arith.constant 0 : i32
    %20 = arith.cmpi ne, %19, %c0_i32_10 : i32
    scf.if %20 {
      %c0_11 = arith.constant 0 : index
      %c0_12 = arith.constant 0 : index
      %21 = vector.load %arg7[%c0_11, %c0_12] : memref<16x128xf32, #tpu.memory_space<vmem>>, vector<16x128xf32>
      %22 = arith.addf %21, %2 : vector<16x128xf32>
      %c0_13 = arith.constant 0 : index
      %c0_14 = arith.constant 0 : index
      %23 = vector.load %arg5[%c0_13, %c0_14] : memref<1x128xf32, #tpu.memory_space<vmem>>, vector<1x128xf32>
      %24 = vector.broadcast %23 : vector<1x128xf32> to vector<16x128xf32>
      %25 = arith.addf %22, %24 : vector<16x128xf32>
      %c0_15 = arith.constant 0 : index
      %c0_16 = arith.constant 0 : index
      %26 = vector.load %arg6[%c0_15, %c0_16] : memref<16x128xf32, #tpu.memory_space<vmem>>, vector<16x128xf32>
      tpu.vector_store %arg6[%c0_15, %c0_16], %25 {strides = array<i32>} : memref<16x128xf32, #tpu.memory_space<vmem>>, vector<16x128xf32>,
    } else {
    }
    return
  }
  func.func @transform_0(%arg0: i32, %arg1: i32, %arg2: i32) -> (i32, i32) {
    %c0_i32 = arith.constant 0 : i32
    return %arg0, %arg2 : i32, i32
  }
  func.func @transform_1(%arg0: i32, %arg1: i32, %arg2: i32) -> (i32, i32) {
    %c0_i32 = arith.constant 0 : i32
    return %arg2, %arg1 : i32, i32
  }
  func.func @transform_2(%arg0: i32, %arg1: i32, %arg2: i32) -> (i32, i32) {
    %c0_i32 = arith.constant 0 : i32
    %c0_i32_0 = arith.constant 0 : i32
    return %c0_i32, %arg1 : i32, i32
  }
  func.func @transform_3(%arg0: i32, %arg1: i32, %arg2: i32) -> (i32, i32) {
    %c0_i32 = arith.constant 0 : i32
    return %arg0, %arg1 : i32, i32
  }
}

</mosaic_0001>

<llo_original>
// kernel: tpu_custom_call.1
$region0: #{tpu_custom_call.1}
  #allocation0 [shape = 'u32[]', space=smem, size = 0x4, offset = 0x4, fixed_abs, tag = 'smem constant byte address 0x4 - core index']
  #allocation1 [shape = 'u32[144,128]{1,0:T(1,128)}', space=vmem, size = 0x12000, scoped, tag = 'internal scratch']
  #allocation2 [shape = 'f32[16,128]{1,0:T(8,128)}', space=vmem, size = 0x2000, scoped, tag = 'scratch operand']
  %s0 = inlined_call_operand.hbm [shape: bf16[16,128], index: 0, kind: input, shape index: {}]
  %s1 = inlined_call_operand.hbm [shape: bf16[128,128], index: 1, kind: input, shape index: {}]
  %s2 = inlined_call_operand.vmem [shape: f32[1,128], index: 2, kind: input, shape index: {}]
  %s3 = inlined_call_operand.hbm [shape: f32[16,128], index: 3, kind: output, shape index: {}]
  %s4 = sld [smem:[#allocation0]]
  $region46: #{tpu_custom_call.1} parent=0
    _
  %s6 = ssub.s32 1, %s4
  %s7 = scalar_select 0, %s6, %s4
  $region1: #{tpu_custom_call.1} parent=0
    #allocation3 [shape = 'u8[4096]{0}', space=vmem, size = 0x1000, scoped, tag = 'input window, operand 0, single buffered']
    #allocation4 [shape = 's32[1]{0}', space=sflag, size = 0x4, scoped, tag = 'scoped memory for tpu_custom_call.1']
    #allocation5 [shape = 's32[1]{0}', space=sflag, size = 0x4, scoped, tag = 'scoped memory for tpu_custom_call.1']
    #allocation6 [shape = 'u8[32768]{0}', space=vmem, size = 0x8000, scoped, tag = 'input window, operand 1, single buffered']
    #allocation7 [shape = 's32[1]{0}', space=sflag, size = 0x4, scoped, tag = 'scoped memory for tpu_custom_call.1']
    #allocation8 [shape = 'u8[8192]{0}', space=vmem, size = 0x2000, scoped, tag = 'output window, operand 0, single buffered']
    %8 = vsyncpa [#allocation4], 0
    %9 = vsyncpa [#allocation7], 0
    %10 = vsyncpa [#allocation5], 0
    // Predicated region
    $region2: #{tpu_custom_call.1} parent=1 // pred_check
      _
    $region3: #{tpu_custom_call.1} parent=1 // pred_check_branch
      %12 = sbr.rel (0) target = $region5
    $region4: #{tpu_custom_call.1} parent=1 // pred_region
      %s14 = ssub.s32 128, 128
      %15 = vsyncadd [#allocation4], %s14
      %s16 = sshll.u32 [#allocation3], 4
      %s17 = int_to_ptr.vmem [resolvable:$true] %s16
      %22 = dma.hbm_to_vmem [thread:$0]  %s0, 128, %s17, [#allocation4], 64, 64, 4
    $region5: #{tpu_custom_call.1} parent=1 // pred_fallthru
      _
    // Predicated region
    $region6: #{tpu_custom_call.1} parent=1 // pred_check
      _
    $region7: #{tpu_custom_call.1} parent=1 // pred_check_branch
      %24 = sbr.rel (0) target = $region9
    $region8: #{tpu_custom_call.1} parent=1 // pred_region
      %s26 = ssub.s32 1024, 1024
      %27 = vsyncadd [#allocation7], %s26
      %s28 = sshll.u32 [#allocation6], 4
      %s29 = int_to_ptr.vmem [resolvable:$true] %s28
      %34 = dma.hbm_to_vmem [thread:$0]  %s1, 1024, %s29, [#allocation7], 64, 64, 4
    $region9: #{tpu_custom_call.1} parent=1 // pred_fallthru
      _
    // Predicated region
    $region10: #{tpu_custom_call.1} parent=1 // pred_check
      _
    $region11: #{tpu_custom_call.1} parent=1 // pred_check_branch
      %36 = sbr.rel (0) target = $region13
    $region12: #{tpu_custom_call.1} parent=1 // pred_region
      _
    $region13: #{tpu_custom_call.1} parent=1 // pred_fallthru
      _
    // Predicated region
    $region14: #{tpu_custom_call.1} parent=1 // pred_check
      _
    $region15: #{tpu_custom_call.1} parent=1 // pred_check_branch
      %38 = sbr.rel (0) target = $region17
    $region16: #{tpu_custom_call.1} parent=1 // pred_region
      %39 = dma.done [#allocation4], 128
    $region17: #{tpu_custom_call.1} parent=1 // pred_fallthru
      _
    // Predicated region
    $region18: #{tpu_custom_call.1} parent=1 // pred_check
      _
    $region19: #{tpu_custom_call.1} parent=1 // pred_check_branch
      %41 = sbr.rel (0) target = $region21
    $region20: #{tpu_custom_call.1} parent=1 // pred_region
      %42 = dma.done [#allocation7], 1024
    $region21: #{tpu_custom_call.1} parent=1 // pred_fallthru
      _
    %v44 = vld [vmem:[#allocation3] sm:$0xf]
    %v45 = vld [vmem:[#allocation3 + $0x4] sm:$0xf]
    %v46 = vld [vmem:[#allocation6] sm:$0xf]
    %v47 = vld [vmem:[#allocation6 + $0x4] sm:$0xf]
    %v48 = vld [vmem:[#allocation6 + $0x8] sm:$0xf]
    %v49 = vld [vmem:[#allocation6 + $0xc] sm:$0xf]
    %v50 = vld [vmem:[#allocation6 + $0x10] sm:$0xf]
    %v51 = vld [vmem:[#allocation6 + $0x14] sm:$0xf]
    %v52 = vld [vmem:[#allocation6 + $0x18] sm:$0xf]
    %v53 = vld [vmem:[#allocation6 + $0x1c] sm:$0xf]
    %v54 = vld [vmem:[#allocation6 + $0x20] sm:$0xf]
    %v55 = vld [vmem:[#allocation6 + $0x24] sm:$0xf]
    %v56 = vld [vmem:[#allocation6 + $0x28] sm:$0xf]
    %v57 = vld [vmem:[#allocation6 + $0x2c] sm:$0xf]
    %v58 = vld [vmem:[#allocation6 + $0x30] sm:$0xf]
    %v59 = vld [vmem:[#allocation6 + $0x34] sm:$0xf]
    %v60 = vld [vmem:[#allocation6 + $0x38] sm:$0xf]
    %v61 = vld [vmem:[#allocation6 + $0x3c] sm:$0xf]
    %v64 = vunpack.c.l.b16 %v44
    %v65 = vunpack.c.l.b16 %v45
    %v66 = vpack.c.b16 %v65, %v64
    %v84 = vunpack.c.l.b16 %v46
    %v85 = vunpack.c.l.b16 %v47
    %v86 = vunpack.c.l.b16 %v48
    %v87 = vunpack.c.l.b16 %v49
    %v88 = vunpack.c.l.b16 %v50
    %v89 = vunpack.c.l.b16 %v51
    %v90 = vunpack.c.l.b16 %v52
    %v91 = vunpack.c.l.b16 %v53
    %v92 = vunpack.c.l.b16 %v54
    %v93 = vunpack.c.l.b16 %v55
    %v94 = vunpack.c.l.b16 %v56
    %v95 = vunpack.c.l.b16 %v57
    %v96 = vunpack.c.l.b16 %v58
    %v97 = vunpack.c.l.b16 %v59
    %v98 = vunpack.c.l.b16 %v60
    %v99 = vunpack.c.l.b16 %v61
    %v100 = vpack.c.b16 %v85, %v84
    %v101 = vpack.c.b16 %v87, %v86
    %v102 = vpack.c.b16 %v89, %v88
    %v103 = vpack.c.b16 %v91, %v90
    %v104 = vpack.c.b16 %v93, %v92
    %v105 = vpack.c.b16 %v95, %v94
    %v106 = vpack.c.b16 %v97, %v96
    %v107 = vpack.c.b16 %v99, %v98
    %116 = vmatprep.subr.bf16.mxu0 0
    %117 = vmatpush1.bf16.msra.mxu0 %v100
    %118 = vmatprep.subr.bf16.mxu0 0
    %119 = vmatpush1.bf16.msra.mxu0 %v101
    %120 = vmatprep.subr.bf16.mxu0 0
    %121 = vmatpush1.bf16.msra.mxu0 %v102
    %122 = vmatprep.subr.bf16.mxu0 0
    %123 = vmatpush1.bf16.msra.mxu0 %v103
    %124 = vmatprep.subr.bf16.mxu0 0
    %125 = vmatpush1.bf16.msra.mxu0 %v104
    %126 = vmatprep.subr.bf16.mxu0 0
    %127 = vmatpush1.bf16.msra.mxu0 %v105
    %128 = vmatprep.subr.bf16.mxu0 0
    %129 = vmatpush1.bf16.msra.mxu0 %v106
    %130 = vmatprep.subr.bf16.mxu0 0
    %131 = vmatpush1.bf16.msra.mxu0 %v107
    %132 = vmatprep.subr.bf16.mxu0 0
    %133 = vmatpush1.bf16.msra.mxu0 0
    %134 = vmatprep.subr.bf16.mxu0 0
    %135 = vmatpush1.bf16.msra.mxu0 0
    %136 = vmatprep.subr.bf16.mxu0 0
    %137 = vmatpush1.bf16.msra.mxu0 0
    %138 = vmatprep.subr.bf16.mxu0 0
    %139 = vmatpush1.bf16.msra.mxu0 0
    %140 = vmatprep.subr.bf16.mxu0 0
    %141 = vmatpush1.bf16.msra.mxu0 0
    %142 = vmatprep.subr.bf16.mxu0 0
    %143 = vmatpush1.bf16.msra.mxu0 0
    %144 = vmatprep.subr.bf16.mxu0 0
    %145 = vmatpush1.bf16.msra.mxu0 0
    %146 = vmatprep.subr.bf16.mxu0 0
    %147 = vmatpush1.bf16.msra.mxu0 0
    %148 = vmatprep.mubr.bf16.mxu0 0
    %149 = vmatmul.mubr.bf16.gmra.mrb[0].mxu0 %v66
    %v150 = vpop.f32.mrb[0].mxu0
    %v151 = vadd.f32 0.0, %v150
    %v152 = vpop.f32.mrb[0].mxu0
    %v153 = vpop.f32.mrb[0].mxu0
    %v154 = vadd.f32 0.0, %v153
    %v155 = vpop.f32.mrb[0].mxu0
    %156 = vdwg.mxu0
    %p157 = scmp.eq.s32.totalorder 0, 0
    // Predicated region
    $region22: #{tpu_custom_call.1} parent=1 // pred_check
      %p158 = pneg %p157
    $region23: #{tpu_custom_call.1} parent=1 // pred_check_branch
      %160 = sbr.rel (%p158) target = $region25
    $region24: #{tpu_custom_call.1} parent=1 // pred_region
      %v161 = vld [vmem:[%s2] sm:$0x1]
      %v163 = vlaneseq
      %v164 = vshrl.u32 %v163, 7
      %v165 = vsub.s32 0, %v164
      %v166 = vrot.slane %v161, %v165
      %v168 = vadd.f32 %v151, %v166
      %v169 = vadd.f32 %v154, %v166
      %170 = vst [vmem:[#allocation8] sm:$0xff] %v168
      %171 = vst [vmem:[#allocation8 + $0x8] sm:$0xff] %v169
    $region25: #{tpu_custom_call.1} parent=1 // pred_fallthru
      _
    %p172 = scmp.ne.s32.totalorder 0, 0
    %p173 = pnand %p157, %p172
    %p174 = pneg %p173
    // Predicated region
    $region26: #{tpu_custom_call.1} parent=1 // pred_check
      _
    $region27: #{tpu_custom_call.1} parent=1 // pred_check_branch
      %176 = sbr.rel (%p173) target = $region29
    $region28: #{tpu_custom_call.1} parent=1 // pred_region
      %177 = vst [vmem:[#allocation2] sm:$0xff] %v151
      %178 = vst [vmem:[#allocation2 + $0x8] sm:$0xff] %v154
    $region29: #{tpu_custom_call.1} parent=1 // pred_fallthru
      _
    // Predicated region
    $region30: #{tpu_custom_call.1} parent=1 // pred_check
      %p179 = pneg %p172
    $region31: #{tpu_custom_call.1} parent=1 // pred_check_branch
      %181 = sbr.rel (%p179) target = $region33
    $region32: #{tpu_custom_call.1} parent=1 // pred_region
      %v182 = vld [vmem:[#allocation2] sm:$0xff]
      %v183 = vld [vmem:[#allocation2 + $0x8] sm:$0xff]
      %v184 = vadd.f32 %v182, %v151
      %v185 = vadd.f32 %v183, %v154
      %186 = vst [vmem:[#allocation2] sm:$0xff] %v184
      %187 = vst [vmem:[#allocation2 + $0x8] sm:$0xff] %v185
    $region33: #{tpu_custom_call.1} parent=1 // pred_fallthru
      _
    // Predicated region
    $region34: #{tpu_custom_call.1} parent=1 // pred_check
      _
    $region35: #{tpu_custom_call.1} parent=1 // pred_check_branch
      %189 = sbr.rel (%p173) target = $region37
    $region36: #{tpu_custom_call.1} parent=1 // pred_region
      %v190 = vld [vmem:[#allocation2] sm:$0xff]
      %v191 = vld [vmem:[#allocation2 + $0x8] sm:$0xff]
      %v192 = vadd.f32 %v190, %v151
      %v193 = vadd.f32 %v191, %v154
      %v194 = vld [vmem:[%s2] sm:$0x1]
      %v196 = vlaneseq
      %v197 = vshrl.u32 %v196, 7
      %v198 = vsub.s32 0, %v197
      %v199 = vrot.slane %v194, %v198
      %v201 = vadd.f32 %v192, %v199
      %v202 = vadd.f32 %v193, %v199
      %203 = vst [vmem:[#allocation8] sm:$0xff] %v201
      %204 = vst [vmem:[#allocation8 + $0x8] sm:$0xff] %v202
    $region37: #{tpu_custom_call.1} parent=1 // pred_fallthru
      _
    // Predicated region
    $region38: #{tpu_custom_call.1} parent=1 // pred_check
      _
    $region39: #{tpu_custom_call.1} parent=1 // pred_check_branch
      %206 = sbr.rel (0) target = $region41
    $region40: #{tpu_custom_call.1} parent=1 // pred_region
      %s208 = ssub.s32 256, 256
      %209 = vsyncadd [#allocation5], %s208
      %s210 = sshll.u32 [#allocation8], 4
      %s211 = int_to_ptr.vmem [resolvable:$true] %s210
      %216 = dma.vmem_to_hbm [thread:$0]  %s211, 256, %s3, [#allocation5], 128, 128, 8
    $region41: #{tpu_custom_call.1} parent=1 // pred_fallthru
      _
    // Predicated region
    $region42: #{tpu_custom_call.1} parent=1 // pred_check
      _
    $region43: #{tpu_custom_call.1} parent=1 // pred_check_branch
      %218 = sbr.rel (0) target = $region45
    $region44: #{tpu_custom_call.1} parent=1 // pred_region
      %219 = dma.done [#allocation5], 256
    $region45: #{tpu_custom_call.1} parent=1 // pred_fallthru
      _
    %220 = vsyncpa [#allocation4], 1
    %221 = vsyncpa [#allocation7], 1
    %222 = vsyncpa [#allocation5], 1

</llo_original>
